<compile_context>
chip_gen: v7x
topology: tpu7x:2x2x1
jax: 0.10.0
libtpu: 0.0.40
codegen_flags: <defaults>
</compile_context>

<pallas_src>
import functools
import math

import jax
import jax.numpy as jnp
from jax import lax
from jax.experimental import pallas as pl
from jax.experimental.pallas import tpu as pltpu


def _gaussian_1d(ksize: int, sigma: float):
    """Matches kornia.filters.get_gaussian_kernel (normalized gaussian taps)."""
    xs = [float(i - ksize // 2) for i in range(ksize)]
    if ksize % 2 == 0:
        xs = [x + 0.5 for x in xs]
    g = [math.exp(-(x * x) / (2.0 * sigma * sigma)) for x in xs]
    s = sum(g)
    return [v / s for v in g]


def _gaussian_2d(kernel_size, sigma):
    ky = _gaussian_1d(kernel_size[0], sigma[0])
    kx = _gaussian_1d(kernel_size[1], sigma[1])
    return [[a * b for b in kx] for a in ky]


def _blur_kernel(x_ref, top_ref, bot_ref, o_ref, *, ky, kx):
    """Separable gaussian on one (P planes x TH rows x W cols) block.

    x_ref  : (P, TH, W)        row strip of P planes
    top_ref: (P, 1, max(ph,1), W)  ph rows just above the strip (zeros at image top)
    bot_ref: (P, 1, max(ph,1), W)  ph rows just below the strip (zeros at image bottom)
    o_ref  : (P, TH, W)
    """
    p_blk, th, w = o_ref.shape
    kh, kw = len(ky), len(kx)
    ph, pw = (kh - 1) // 2, (kw - 1) // 2
    f32 = jnp.float32

    center = x_ref[...].astype(f32)                                   # (P, TH, W)

    # ---- vertical (row / sublane) pass: halo rows come from neighbouring strips ----
    if ph == 0:
        ext = center
    else:
        top = top_ref[...].astype(f32).reshape(p_blk, top_ref.shape[2], w)
        bot = bot_ref[...].astype(f32).reshape(p_blk, bot_ref.shape[2], w)
        ext = jnp.concatenate([top, center, bot], axis=1)             # (P, TH+2ph, W)
    vert = ky[0] * ext[:, 0:th, :]
    for dy in range(1, kh):
        vert = vert + ky[dy] * ext[:, dy:dy + th, :]

    # ---- horizontal (col / lane) pass: zero padding at the image border ----
    if pw == 0:
        extw = vert
    else:
        zcol = jnp.zeros((p_blk, th, pw), f32)
        extw = jnp.concatenate([zcol, vert, zcol], axis=2)            # (P, TH, W+2pw)
    out = kx[0] * extw[:, :, 0:w]
    for dx in range(1, kw):
        out = out + kx[dx] * extw[:, :, dx:dx + w]

    o_ref[...] = out.astype(o_ref.dtype)


def _choose_tiles(n_planes, h, w, kh, dtype_bytes,
                  strip_budget_bytes=2 * 1024 * 1024,
                  block_budget_bytes=4 * 1024 * 1024):
    """Pick (rows-per-strip TH, planes-per-step P).

    Double-buffered in+out blocks stay ~<= 16-20 MiB so the kernel fits v7x's 64 MiB
    VMEM (and v5e/v6e defaults) while tiles stay big enough to hide per-step overhead.
    """
    row_bytes = w * dtype_bytes
    if h * row_bytes <= strip_budget_bytes:
        th = h                                    # whole plane height fits comfortably
    else:
        th = h                                    # fallback: whole plane (rare: no good divisor)
        for cand in range(h - 1, 7, -1):
            if (h % cand == 0 and cand % 8 == 0 and cand >= kh
                    and cand * row_bytes <= strip_budget_bytes):
                th = cand
                break
    p_blk = 1
    for cand in range(n_planes, 0, -1):
        if n_planes % cand == 0 and cand * th * row_bytes <= block_budget_bytes:
            p_blk = cand
            break
    return th, p_blk


def gaussian_blur(x, kernel_size=(3, 3), sigma=(1.5, 1.5), *,
                  tile_rows=None, planes_per_step=None):
    """x: (3, C, H, W) -> (3, C, H, W). Matches GaussianBlur.forward (odd kernel sizes)."""
    assert x.ndim == 4, "expect BxCxHxW"
    b, c, h, w = x.shape
    assert b == 3, "groups=3 conv in the reference module requires dim0 == 3"
    kh, kw = kernel_size
    # TODO(synk): even kernel sizes shrink the output (matches the conv formula) and are
    # not supported by this fast path; the module is only used with odd sizes.
    assert kh % 2 == 1 and kw % 2 == 1, "odd kernel sizes only"
    ph = (kh - 1) // 2

    ky = tuple(_gaussian_1d(kh, float(sigma[0])))
    kx = tuple(_gaussian_1d(kw, float(sigma[1])))

    n = b * c
    xp = x.reshape(n, h, w)
    dtype_bytes = jnp.dtype(x.dtype).itemsize

    th, p_blk = _choose_tiles(n, h, w, kh, dtype_bytes)
    if tile_rows is not None:
        assert h % tile_rows == 0 and (tile_rows % 8 == 0 or tile_rows == h)
        assert tile_rows >= kh
        th = tile_rows
    if planes_per_step is not None:
        assert n % planes_per_step == 0
        p_blk = planes_per_step
    n_strips = h // th

    # Tiny per-strip halo side-inputs: the ph rows just above / below each strip.
    # Border strips get zeros, which also implements the conv's zero padding.
    # (Only 2*ph rows per strip are re-read -- negligible vs. the old full-tensor pad pass.)
    hpad = max(ph, 1)
    if n_strips == 1 or ph == 0:
        halo_top = jnp.zeros((n, n_strips, hpad, w), x.dtype)
        halo_bot = jnp.zeros((n, n_strips, hpad, w), x.dtype)
    else:
        strips = xp.reshape(n, n_strips, th, w)
        zrow = jnp.zeros((n, 1, ph, w), x.dtype)
        halo_top = jnp.concatenate([zrow, strips[:, :-1, th - ph:, :]], axis=1)
        halo_bot = jnp.concatenate([strips[:, 1:, :ph, :], zrow], axis=1)

    kernel = functools.partial(_blur_kernel, ky=ky, kx=kx)

    out = pl.pallas_call(
        kernel,
        out_shape=jax.ShapeDtypeStruct((n, h, w), x.dtype),
        grid=(n // p_blk, n_strips),
        in_specs=[
            pl.BlockSpec((p_blk, th, w), lambda p, s: (p, s, 0)),
            pl.BlockSpec((p_blk, 1, hpad, w), lambda p, s: (p, s, 0, 0)),
            pl.BlockSpec((p_blk, 1, hpad, w), lambda p, s: (p, s, 0, 0)),
        ],
        out_specs=pl.BlockSpec((p_blk, th, w), lambda p, s: (p, s, 0)),
        compiler_params=pltpu.CompilerParams(
            dimension_semantics=("parallel", "parallel"),
            vmem_limit_bytes=48 * 1024 * 1024,
        ),
    )(xp, halo_top, halo_bot)
    return out.reshape(b, c, h, w)


def _reference(x, kernel_size=(3, 3), sigma=(1.5, 1.5)):
    """Pure-JAX reference replicating the torch forward exactly."""
    kh, kw = kernel_size
    ph, pw = (kh - 1) // 2, (kw - 1) // 2
    k2d = jnp.asarray(_gaussian_2d(kernel_size, sigma), dtype=jnp.float32)
    rhs = jnp.broadcast_to(k2d[None, None], (3, 1, kh, kw))   # (O=3, I/groups=1, kh, kw)
    lhs = jnp.transpose(x, (1, 0, 2, 3))                      # (C, 3, H, W)
    y = lax.conv_general_dilated(
        lhs, rhs,
        window_strides=(1, 1),
        padding=[(ph, ph), (pw, pw)],
        feature_group_count=3,
        dimension_numbers=("NCHW", "OIHW", "NCHW"),
    )
    return jnp.transpose(y, (1, 0, 2, 3))


if __name__ == "__main__":
    key = jax.random.PRNGKey(0)
    k1, k2, k3 = jax.random.split(key, 3)

    # Shape implied by the module's forward: dim0 == 3 (RGB planes), C frames.
    x = jax.random.uniform(k1, (3, 4, 16, 16), dtype=jnp.float32)
    y = jax.block_until_ready(gaussian_blur(x, (3, 3), (1.5, 1.5)))
    y_ref = jax.block_until_ready(_reference(x, (3, 3), (1.5, 1.5)))
    assert y.shape == x.shape
    assert jnp.allclose(y, y_ref, atol=1e-5, rtol=1e-5), "mismatch vs reference conv"

    # Exercise the tiled path: multiple row strips, multiple plane blocks, lane-dense W.
    x2 = jax.random.uniform(k2, (3, 2, 32, 128), dtype=jnp.float32)
    y2 = jax.block_until_ready(
        gaussian_blur(x2, (3, 3), (1.5, 1.5), tile_rows=16, planes_per_step=3))
    y2_ref = _reference(x2, (3, 3), (1.5, 1.5))
    assert jnp.allclose(y2, y2_ref, atol=1e-5, rtol=1e-5), "tiled-path mismatch"

    # Larger, asymmetric gaussian (ph=2 halo rows per strip).
    x3 = jax.random.uniform(k3, (3, 2, 24, 32), dtype=jnp.float32)
    y3 = jax.block_until_ready(
        gaussian_blur(x3, (5, 5), (2.0, 1.0), tile_rows=8, planes_per_step=2))
    y3_ref = _reference(x3, (5, 5), (2.0, 1.0))
    assert jnp.allclose(y3, y3_ref, atol=1e-5, rtol=1e-5), "5x5 mismatch"

    print("KERNEL_OK")
</pallas_src>

<mosaic_0001>
module attributes {stable_mosaic.version = 11 : i64} {
  func.func @_blur_kernel(%arg0: i32, %arg1: i32, %arg2: memref<12x16x16xf32, #tpu.memory_space<vmem>>, %arg3: memref<12x1x1x16xf32, #tpu.memory_space<vmem>>, %arg4: memref<12x1x1x16xf32, #tpu.memory_space<vmem>>, %arg5: memref<12x16x16xf32, #tpu.memory_space<vmem>>) attributes {dimension_semantics = [#tpu.dimension_semantics<parallel>, #tpu.dimension_semantics<parallel>], iteration_bounds = array<i64: 1, 1>, scalar_prefetch = 0 : i64, scratch_operands = 0 : i64, tpu.core_type = #tpu.core_type<tc>, window_params = [{transform_indices = @transform_0, window_bounds = array<i64: 12, 16, 16>}, {transform_indices = @transform_1, window_bounds = array<i64: 12, 1, 1, 16>}, {transform_indices = @transform_2, window_bounds = array<i64: 12, 1, 1, 16>}, {transform_indices = @transform_3, window_bounds = array<i64: 12, 16, 16>}]} {
    %c0 = arith.constant 0 : index
    %c0_0 = arith.constant 0 : index
    %c0_1 = arith.constant 0 : index
    %0 = vector.load %arg2[%c0, %c0_0, %c0_1] : memref<12x16x16xf32, #tpu.memory_space<vmem>>, vector<12x16x16xf32>
    %c0_2 = arith.constant 0 : index
    %c0_3 = arith.constant 0 : index
    %c0_4 = arith.constant 0 : index
    %c0_5 = arith.constant 0 : index
    %1 = vector.load %arg3[%c0_2, %c0_3, %c0_4, %c0_5] : memref<12x1x1x16xf32, #tpu.memory_space<vmem>>, vector<12x1x1x16xf32>
    %2 = vector.shape_cast %1 : vector<12x1x1x16xf32> to vector<12x1x16xf32>
    %c0_6 = arith.constant 0 : index
    %c0_7 = arith.constant 0 : index
    %c0_8 = arith.constant 0 : index
    %c0_9 = arith.constant 0 : index
    %3 = vector.load %arg4[%c0_6, %c0_7, %c0_8, %c0_9] : memref<12x1x1x16xf32, #tpu.memory_space<vmem>>, vector<12x1x1x16xf32>
    %4 = vector.shape_cast %3 : vector<12x1x1x16xf32> to vector<12x1x16xf32>
    %5 = tpu.concatenate %2, %0, %4 in 1 : vector<12x1x16xf32>, vector<12x16x16xf32>, vector<12x1x16xf32> -> vector<12x18x16xf32>
    %6 = vector.extract_strided_slice %5 {offsets = [0, 0, 0], sizes = [12, 16, 16], strides = [1, 1, 1]} : vector<12x18x16xf32> to vector<12x16x16xf32>
    %cst = arith.constant 0.307801336 : f32
    %7 = vector.broadcast %cst : f32 to vector<12x16x16xf32>
    %8 = arith.mulf %7, %6 : vector<12x16x16xf32>
    %9 = vector.extract_strided_slice %5 {offsets = [0, 1, 0], sizes = [12, 16, 16], strides = [1, 1, 1]} : vector<12x18x16xf32> to vector<12x16x16xf32>
    %cst_10 = arith.constant 0.384397328 : f32
    %10 = vector.broadcast %cst_10 : f32 to vector<12x16x16xf32>
    %11 = arith.mulf %10, %9 : vector<12x16x16xf32>
    %12 = arith.addf %8, %11 : vector<12x16x16xf32>
    %13 = vector.extract_strided_slice %5 {offsets = [0, 2, 0], sizes = [12, 16, 16], strides = [1, 1, 1]} : vector<12x18x16xf32> to vector<12x16x16xf32>
    %cst_11 = arith.constant 0.307801336 : f32
    %14 = vector.broadcast %cst_11 : f32 to vector<12x16x16xf32>
    %15 = arith.mulf %14, %13 : vector<12x16x16xf32>
    %16 = arith.addf %12, %15 : vector<12x16x16xf32>
    %cst_12 = arith.constant 0.000000e+00 : f32
    %17 = vector.broadcast %cst_12 : f32 to vector<12x16x1xf32>
    %18 = tpu.concatenate %17, %16, %17 in 2 : vector<12x16x1xf32>, vector<12x16x16xf32>, vector<12x16x1xf32> -> vector<12x16x18xf32>
    %19 = vector.extract_strided_slice %18 {offsets = [0, 0, 0], sizes = [12, 16, 16], strides = [1, 1, 1]} : vector<12x16x18xf32> to vector<12x16x16xf32>
    %cst_13 = arith.constant 0.307801336 : f32
    %20 = vector.broadcast %cst_13 : f32 to vector<12x16x16xf32>
    %21 = arith.mulf %20, %19 : vector<12x16x16xf32>
    %22 = vector.extract_strided_slice %18 {offsets = [0, 0, 1], sizes = [12, 16, 16], strides = [1, 1, 1]} : vector<12x16x18xf32> to vector<12x16x16xf32>
    %cst_14 = arith.constant 0.384397328 : f32
    %23 = vector.broadcast %cst_14 : f32 to vector<12x16x16xf32>
    %24 = arith.mulf %23, %22 : vector<12x16x16xf32>
    %25 = arith.addf %21, %24 : vector<12x16x16xf32>
    %26 = vector.extract_strided_slice %18 {offsets = [0, 0, 2], sizes = [12, 16, 16], strides = [1, 1, 1]} : vector<12x16x18xf32> to vector<12x16x16xf32>
    %cst_15 = arith.constant 0.307801336 : f32
    %27 = vector.broadcast %cst_15 : f32 to vector<12x16x16xf32>
    %28 = arith.mulf %27, %26 : vector<12x16x16xf32>
    %29 = arith.addf %25, %28 : vector<12x16x16xf32>
    %c0_16 = arith.constant 0 : index
    %c0_17 = arith.constant 0 : index
    %c0_18 = arith.constant 0 : index
    %30 = vector.load %arg5[%c0_16, %c0_17, %c0_18] : memref<12x16x16xf32, #tpu.memory_space<vmem>>, vector<12x16x16xf32>
    tpu.vector_store %arg5[%c0_16, %c0_17, %c0_18], %29 {strides = array<i32>} : memref<12x16x16xf32, #tpu.memory_space<vmem>>, vector<12x16x16xf32>,
    return
  }
  func.func @transform_0(%arg0: i32, %arg1: i32) -> (i32, i32, i32) {
    %c0_i32 = arith.constant 0 : i32
    %c0_i32_0 = arith.constant 0 : i32
    return %arg0, %arg1, %c0_i32 : i32, i32, i32
  }
  func.func @transform_1(%arg0: i32, %arg1: i32) -> (i32, i32, i32, i32) {
    %c0_i32 = arith.constant 0 : i32
    %c0_i32_0 = arith.constant 0 : i32
    %c0_i32_1 = arith.constant 0 : i32
    return %arg0, %arg1, %c0_i32, %c0_i32_0 : i32, i32, i32, i32
  }
  func.func @transform_2(%arg0: i32, %arg1: i32) -> (i32, i32, i32, i32) {
    %c0_i32 = arith.constant 0 : i32
    %c0_i32_0 = arith.constant 0 : i32
    %c0_i32_1 = arith.constant 0 : i32
    return %arg0, %arg1, %c0_i32, %c0_i32_0 : i32, i32, i32, i32
  }
  func.func @transform_3(%arg0: i32, %arg1: i32) -> (i32, i32, i32) {
    %c0_i32 = arith.constant 0 : i32
    %c0_i32_0 = arith.constant 0 : i32
    return %arg0, %arg1, %c0_i32 : i32, i32, i32
  }
}

</mosaic_0001>

<llo_original>
// kernel: tpu_custom_call.1
$region0: #{tpu_custom_call.1}
  #allocation0 [shape = 'u32[]', space=smem, size = 0x4, offset = 0x4, fixed_abs, tag = 'smem constant byte address 0x4 - core index']
  #allocation1 [shape = 'u32[144,128]{1,0:T(1,128)}', space=vmem, size = 0x12000, scoped, tag = 'internal scratch']
  %s0 = inlined_call_operand.hbm [shape: f32[12,16,16], index: 0, kind: input, shape index: {}]
  %s1 = inlined_call_operand.hbm [shape: f32[12,1,1,16], index: 1, kind: input, shape index: {}]
  %s2 = inlined_call_operand.hbm [shape: f32[12,1,1,16], index: 2, kind: input, shape index: {}]
  %s3 = inlined_call_operand.hbm [shape: f32[12,16,16], index: 3, kind: output, shape index: {}]
  %s4 = sld [smem:[#allocation0]]
  $region34: #{tpu_custom_call.1} parent=0
    _
  %s6 = ssub.s32 1, %s4
  %s7 = scalar_select 0, %s6, %s4
  $region1: #{tpu_custom_call.1} parent=0
    #allocation2 [shape = 'u8[98304]{0}', space=vmem, size = 0x18000, scoped, tag = 'input window, operand 0, single buffered']
    #allocation3 [shape = 's32[1]{0}', space=sflag, size = 0x4, scoped, tag = 'scoped memory for tpu_custom_call.1']
    #allocation4 [shape = 's32[1]{0}', space=sflag, size = 0x4, scoped, tag = 'scoped memory for tpu_custom_call.1']
    #allocation5 [shape = 'u8[6144]{0}', space=vmem, size = 0x1800, scoped, tag = 'input window, operand 1, single buffered']
    #allocation6 [shape = 's32[1]{0}', space=sflag, size = 0x4, scoped, tag = 'scoped memory for tpu_custom_call.1']
    #allocation7 [shape = 'u8[6144]{0}', space=vmem, size = 0x1800, scoped, tag = 'input window, operand 2, single buffered']
    #allocation8 [shape = 'u8[98304]{0}', space=vmem, size = 0x18000, scoped, tag = 'output window, operand 0, single buffered']
    %8 = vsyncpa [#allocation3], 0
    %9 = vsyncpa [#allocation6], 0
    %10 = vsyncpa [#allocation4], 0
    // Predicated region
    $region2: #{tpu_custom_call.1} parent=1 // pred_check
      _
    $region3: #{tpu_custom_call.1} parent=1 // pred_check_branch
      %12 = sbr.rel (0) target = $region5
    $region4: #{tpu_custom_call.1} parent=1 // pred_region
      %s14 = ssub.s32 3072, 3072
      %15 = vsyncadd [#allocation3], %s14
      %s16 = sshll.u32 [#allocation2], 4
      %s17 = int_to_ptr.vmem [resolvable:$true] %s16
      %22 = dma.hbm_to_vmem [thread:$0]  %s0, 3072, %s17, [#allocation3], 128, 128, 8
    $region5: #{tpu_custom_call.1} parent=1 // pred_fallthru
      _
    // Predicated region
    $region6: #{tpu_custom_call.1} parent=1 // pred_check
      _
    $region7: #{tpu_custom_call.1} parent=1 // pred_check_branch
      %24 = sbr.rel (0) target = $region9
    $region8: #{tpu_custom_call.1} parent=1 // pred_region
      %s26 = ssub.s32 192, 192
      %27 = vsyncadd [#allocation6], %s26
      %s28 = sshll.u32 [#allocation5], 4
      %s29 = int_to_ptr.vmem [resolvable:$true] %s28
      %34 = dma.hbm_to_vmem [thread:$0]  %s1, 192, %s29, [#allocation6], 16, 16, 1
    $region9: #{tpu_custom_call.1} parent=1 // pred_fallthru
      _
    // Predicated region
    $region10: #{tpu_custom_call.1} parent=1 // pred_check
      _
    $region11: #{tpu_custom_call.1} parent=1 // pred_check_branch
      %36 = sbr.rel (0) target = $region13
    $region12: #{tpu_custom_call.1} parent=1 // pred_region
      %s38 = ssub.s32 192, 192
      %39 = vsyncadd [#allocation6], %s38
      %s40 = sshll.u32 [#allocation7], 4
      %s41 = int_to_ptr.vmem [resolvable:$true] %s40
      %46 = dma.hbm_to_vmem [thread:$0]  %s2, 192, %s41, [#allocation6], 16, 16, 1
    $region13: #{tpu_custom_call.1} parent=1 // pred_fallthru
      _
    // Predicated region
    $region14: #{tpu_custom_call.1} parent=1 // pred_check
      _
    $region15: #{tpu_custom_call.1} parent=1 // pred_check_branch
      %48 = sbr.rel (0) target = $region17
    $region16: #{tpu_custom_call.1} parent=1 // pred_region
      %49 = dma.done [#allocation3], 3072
    $region17: #{tpu_custom_call.1} parent=1 // pred_fallthru
      _
    // Predicated region
    $region18: #{tpu_custom_call.1} parent=1 // pred_check
      _
    $region19: #{tpu_custom_call.1} parent=1 // pred_check_branch
      %51 = sbr.rel (0) target = $region21
    $region20: #{tpu_custom_call.1} parent=1 // pred_region
      %52 = dma.done [#allocation6], 192
    $region21: #{tpu_custom_call.1} parent=1 // pred_fallthru
      _
    // Predicated region
    $region22: #{tpu_custom_call.1} parent=1 // pred_check
      _
    $region23: #{tpu_custom_call.1} parent=1 // pred_check_branch
      %54 = sbr.rel (0) target = $region25
    $region24: #{tpu_custom_call.1} parent=1 // pred_region
      %55 = dma.done [#allocation6], 192
    $region25: #{tpu_custom_call.1} parent=1 // pred_fallthru
      _
    %v56 = vld [vmem:[#allocation2] sm:$0xff]
    %v57 = vld [vmem:[#allocation2 + $0x8] sm:$0xff]
    %v58 = vld [vmem:[#allocation2 + $0x10] sm:$0xff]
    %v59 = vld [vmem:[#allocation2 + $0x18] sm:$0xff]
    %v60 = vld [vmem:[#allocation2 + $0x20] sm:$0xff]
    %v61 = vld [vmem:[#allocation2 + $0x28] sm:$0xff]
    %v62 = vld [vmem:[#allocation2 + $0x30] sm:$0xff]
    %v63 = vld [vmem:[#allocation2 + $0x38] sm:$0xff]
    %v64 = vld [vmem:[#allocation2 + $0x40] sm:$0xff]
    %v65 = vld [vmem:[#allocation2 + $0x48] sm:$0xff]
    %v66 = vld [vmem:[#allocation2 + $0x50] sm:$0xff]
    %v67 = vld [vmem:[#allocation2 + $0x58] sm:$0xff]
    %v68 = vld [vmem:[#allocation2 + $0x60] sm:$0xff]
    %v69 = vld [vmem:[#allocation2 + $0x68] sm:$0xff]
    %v70 = vld [vmem:[#allocation2 + $0x70] sm:$0xff]
    %v71 = vld [vmem:[#allocation2 + $0x78] sm:$0xff]
    %v72 = vld [vmem:[#allocation2 + $0x80] sm:$0xff]
    %v73 = vld [vmem:[#allocation2 + $0x88] sm:$0xff]
    %v74 = vld [vmem:[#allocation2 + $0x90] sm:$0xff]
    %v75 = vld [vmem:[#allocation2 + $0x98] sm:$0xff]
    %v76 = vld [vmem:[#allocation2 + $0xa0] sm:$0xff]
    %v77 = vld [vmem:[#allocation2 + $0xa8] sm:$0xff]
    %v78 = vld [vmem:[#allocation2 + $0xb0] sm:$0xff]
    %v79 = vld [vmem:[#allocation2 + $0xb8] sm:$0xff]
    %v80 = vld [vmem:[#allocation5] sm:$0x1]
    %v81 = vld [vmem:[#allocation5 + $0x1] sm:$0x1]
    %v82 = vld [vmem:[#allocation5 + $0x2] sm:$0x1]
    %v83 = vld [vmem:[#allocation5 + $0x3] sm:$0x1]
    %v84 = vld [vmem:[#allocation5 + $0x4] sm:$0x1]
    %v85 = vld [vmem:[#allocation5 + $0x5] sm:$0x1]
    %v86 = vld [vmem:[#allocation5 + $0x6] sm:$0x1]
    %v87 = vld [vmem:[#allocation5 + $0x7] sm:$0x1]
    %v88 = vld [vmem:[#allocation5 + $0x8] sm:$0x1]
    %v89 = vld [vmem:[#allocation5 + $0x9] sm:$0x1]
    %v90 = vld [vmem:[#allocation5 + $0xa] sm:$0x1]
    %v91 = vld [vmem:[#allocation5 + $0xb] sm:$0x1]
    %v92 = vld [vmem:[#allocation7] sm:$0x1]
    %v93 = vld [vmem:[#allocation7 + $0x1] sm:$0x1]
    %v94 = vld [vmem:[#allocation7 + $0x2] sm:$0x1]
    %v95 = vld [vmem:[#allocation7 + $0x3] sm:$0x1]
    %v96 = vld [vmem:[#allocation7 + $0x4] sm:$0x1]
    %v97 = vld [vmem:[#allocation7 + $0x5] sm:$0x1]
    %v98 = vld [vmem:[#allocation7 + $0x6] sm:$0x1]
    %v99 = vld [vmem:[#allocation7 + $0x7] sm:$0x1]
    %v100 = vld [vmem:[#allocation7 + $0x8] sm:$0x1]
    %v101 = vld [vmem:[#allocation7 + $0x9] sm:$0x1]
    %v102 = vld [vmem:[#allocation7 + $0xa] sm:$0x1]
    %v103 = vld [vmem:[#allocation7 + $0xb] sm:$0x1]
    %vm128 = vcmask 1040384
    %v129 = vrot.slane %v56, 7
    %v130 = vrot.slane %v57, 7
    %v131 = vsel %vm128, %v129, %v130
    %v132 = vrot.slane %v58, 7
    %v133 = vrot.slane %v59, 7
    %v134 = vsel %vm128, %v132, %v133
    %v135 = vrot.slane %v60, 7
    %v136 = vrot.slane %v61, 7
    %v137 = vsel %vm128, %v135, %v136
    %v138 = vrot.slane %v62, 7
    %v139 = vrot.slane %v63, 7
    %v140 = vsel %vm128, %v138, %v139
    %v141 = vrot.slane %v64, 7
    %v142 = vrot.slane %v65, 7
    %v143 = vsel %vm128, %v141, %v142
    %v144 = vrot.slane %v66, 7
    %v145 = vrot.slane %v67, 7
    %v146 = vsel %vm128, %v144, %v145
    %v147 = vrot.slane %v68, 7
    %v148 = vrot.slane %v69, 7
    %v149 = vsel %vm128, %v147, %v148
    %v150 = vrot.slane %v70, 7
    %v151 = vrot.slane %v71, 7
    %v152 = vsel %vm128, %v150, %v151
    %v153 = vrot.slane %v72, 7
    %v154 = vrot.slane %v73, 7
    %v155 = vsel %vm128, %v153, %v154
    %v156 = vrot.slane %v74, 7
    %v157 = vrot.slane %v75, 7
    %v158 = vsel %vm128, %v156, %v157
    %v159 = vrot.slane %v76, 7
    %v160 = vrot.slane %v77, 7
    %v161 = vsel %vm128, %v159, %v160
    %v162 = vrot.slane %v78, 7
    %v163 = vrot.slane %v79, 7
    %v164 = vsel %vm128, %v162, %v163
    %v213 = vlaneseq
    %v214 = vshrl.u32 %v213, 7
    %v215 = vsub.s32 0, %v214
    %v216 = vrot.slane %v92, %v215
    %v217 = vlaneseq
    %v218 = vshrl.u32 %v217, 7
    %v219 = vsub.s32 0, %v218
    %v220 = vrot.slane %v93, %v219
    %v221 = vlaneseq
    %v222 = vshrl.u32 %v221, 7
    %v223 = vsub.s32 0, %v222
    %v224 = vrot.slane %v94, %v223
    %v225 = vlaneseq
    %v226 = vshrl.u32 %v225, 7
    %v227 = vsub.s32 0, %v226
    %v228 = vrot.slane %v95, %v227
    %v229 = vlaneseq
    %v230 = vshrl.u32 %v229, 7
    %v231 = vsub.s32 0, %v230
    %v232 = vrot.slane %v96, %v231
    %v233 = vlaneseq
    %v234 = vshrl.u32 %v233, 7
    %v235 = vsub.s32 0, %v234
    %v236 = vrot.slane %v97, %v235
    %v237 = vlaneseq
    %v238 = vshrl.u32 %v237, 7
    %v239 = vsub.s32 0, %v238
    %v240 = vrot.slane %v98, %v239
    %v241 = vlaneseq
    %v242 = vshrl.u32 %v241, 7
    %v243 = vsub.s32 0, %v242
    %v244 = vrot.slane %v99, %v243
    %v245 = vlaneseq
    %v246 = vshrl.u32 %v245, 7
    %v247 = vsub.s32 0, %v246
    %v248 = vrot.slane %v100, %v247
    %v249 = vlaneseq
    %v250 = vshrl.u32 %v249, 7
    %v251 = vsub.s32 0, %v250
    %v252 = vrot.slane %v101, %v251
    %v253 = vlaneseq
    %v254 = vshrl.u32 %v253, 7
    %v255 = vsub.s32 0, %v254
    %v256 = vrot.slane %v102, %v255
    %v257 = vlaneseq
    %v258 = vshrl.u32 %v257, 7
    %v259 = vsub.s32 0, %v258
    %v260 = vrot.slane %v103, %v259
    %v273 = vsel %vm128, %v80, %v129
    %v274 = vsel %vm128, %v81, %v132
    %v275 = vsel %vm128, %v82, %v135
    %v276 = vsel %vm128, %v83, %v138
    %v277 = vsel %vm128, %v84, %v141
    %v278 = vsel %vm128, %v85, %v144
    %v279 = vsel %vm128, %v86, %v147
    %v280 = vsel %vm128, %v87, %v150
    %v281 = vsel %vm128, %v88, %v153
    %v282 = vsel %vm128, %v89, %v156
    %v283 = vsel %vm128, %v90, %v159
    %v284 = vsel %vm128, %v91, %v162
    %v285 = vsel %vm128, %v130, %v216
    %v286 = vsel %vm128, %v133, %v220
    %v287 = vsel %vm128, %v136, %v224
    %v288 = vsel %vm128, %v139, %v228
    %v289 = vsel %vm128, %v142, %v232
    %v290 = vsel %vm128, %v145, %v236
    %v291 = vsel %vm128, %v148, %v240
    %v292 = vsel %vm128, %v151, %v244
    %v293 = vsel %vm128, %v154, %v248
    %v294 = vsel %vm128, %v157, %v252
    %v295 = vsel %vm128, %v160, %v256
    %v296 = vsel %vm128, %v163, %v260
    %v297 = vmul.f32 %v273, 0.30780134
    %v298 = vmul.f32 %v131, 0.30780134
    %v299 = vmul.f32 %v274, 0.30780134
    %v300 = vmul.f32 %v134, 0.30780134
    %v301 = vmul.f32 %v275, 0.30780134
    %v302 = vmul.f32 %v137, 0.30780134
    %v303 = vmul.f32 %v276, 0.30780134
    %v304 = vmul.f32 %v140, 0.30780134
    %v305 = vmul.f32 %v277, 0.30780134
    %v306 = vmul.f32 %v143, 0.30780134
    %v307 = vmul.f32 %v278, 0.30780134
    %v308 = vmul.f32 %v146, 0.30780134
    %v309 = vmul.f32 %v279, 0.30780134
    %v310 = vmul.f32 %v149, 0.30780134
    %v311 = vmul.f32 %v280, 0.30780134
    %v312 = vmul.f32 %v152, 0.30780134
    %v313 = vmul.f32 %v281, 0.30780134
    %v314 = vmul.f32 %v155, 0.30780134
    %v315 = vmul.f32 %v282, 0.30780134
    %v316 = vmul.f32 %v158, 0.30780134
    %v317 = vmul.f32 %v283, 0.30780134
    %v318 = vmul.f32 %v161, 0.30780134
    %v319 = vmul.f32 %v284, 0.30780134
    %v320 = vmul.f32 %v164, 0.30780134
    %v321 = vmul.f32 %v273, 0.38439733
    %v322 = vmul.f32 %v131, 0.38439733
    %v323 = vmul.f32 %v285, 0.38439733
    %v324 = vmul.f32 %v274, 0.38439733
    %v325 = vmul.f32 %v134, 0.38439733
    %v326 = vmul.f32 %v286, 0.38439733
    %v327 = vmul.f32 %v275, 0.38439733
    %v328 = vmul.f32 %v137, 0.38439733
    %v329 = vmul.f32 %v287, 0.38439733
    %v330 = vmul.f32 %v276, 0.38439733
    %v331 = vmul.f32 %v140, 0.38439733
    %v332 = vmul.f32 %v288, 0.38439733
    %v333 = vmul.f32 %v277, 0.38439733
    %v334 = vmul.f32 %v143, 0.38439733
    %v335 = vmul.f32 %v289, 0.38439733
    %v336 = vmul.f32 %v278, 0.38439733
    %v337 = vmul.f32 %v146, 0.38439733
    %v338 = vmul.f32 %v290, 0.38439733
    %v339 = vmul.f32 %v279, 0.38439733
    %v340 = vmul.f32 %v149, 0.38439733
    %v341 = vmul.f32 %v291, 0.38439733
    %v342 = vmul.f32 %v280, 0.38439733
    %v343 = vmul.f32 %v152, 0.38439733
    %v344 = vmul.f32 %v292, 0.38439733
    %v345 = vmul.f32 %v281, 0.38439733
    %v346 = vmul.f32 %v155, 0.38439733
    %v347 = vmul.f32 %v293, 0.38439733
    %v348 = vmul.f32 %v282, 0.38439733
    %v349 = vmul.f32 %v158, 0.38439733
    %v350 = vmul.f32 %v294, 0.38439733
    %v351 = vmul.f32 %v283, 0.38439733
    %v352 = vmul.f32 %v161, 0.38439733
    %v353 = vmul.f32 %v295, 0.38439733
    %v354 = vmul.f32 %v284, 0.38439733
    %v355 = vmul.f32 %v164, 0.38439733
    %v356 = vmul.f32 %v296, 0.38439733
    %vm393 = vcmask 1046528
    %v394 = vrot.slane %v321, 1
    %v395 = vrot.slane %v322, 1
    %v396 = vsel %vm393, %v394, %v395
    %v397 = vrot.slane %v323, 1
    %v398 = vsel %vm393, %v395, %v397
    %v399 = vrot.slane %v324, 1
    %v400 = vrot.slane %v325, 1
    %v401 = vsel %vm393, %v399, %v400
    %v402 = vrot.slane %v326, 1
    %v403 = vsel %vm393, %v400, %v402
    %v404 = vrot.slane %v327, 1
    %v405 = vrot.slane %v328, 1
    %v406 = vsel %vm393, %v404, %v405
    %v407 = vrot.slane %v329, 1
    %v408 = vsel %vm393, %v405, %v407
    %v409 = vrot.slane %v330, 1
    %v410 = vrot.slane %v331, 1
    %v411 = vsel %vm393, %v409, %v410
    %v412 = vrot.slane %v332, 1
    %v413 = vsel %vm393, %v410, %v412
    %v414 = vrot.slane %v333, 1
    %v415 = vrot.slane %v334, 1
    %v416 = vsel %vm393, %v414, %v415
    %v417 = vrot.slane %v335, 1
    %v418 = vsel %vm393, %v415, %v417
    %v419 = vrot.slane %v336, 1
    %v420 = vrot.slane %v337, 1
    %v421 = vsel %vm393, %v419, %v420
    %v422 = vrot.slane %v338, 1
    %v423 = vsel %vm393, %v420, %v422
    %v424 = vrot.slane %v339, 1
    %v425 = vrot.slane %v340, 1
    %v426 = vsel %vm393, %v424, %v425
    %v427 = vrot.slane %v341, 1
    %v428 = vsel %vm393, %v425, %v427
    %v429 = vrot.slane %v342, 1
    %v430 = vrot.slane %v343, 1
    %v431 = vsel %vm393, %v429, %v430
    %v432 = vrot.slane %v344, 1
    %v433 = vsel %vm393, %v430, %v432
    %v434 = vrot.slane %v345, 1
    %v435 = vrot.slane %v346, 1
    %v436 = vsel %vm393, %v434, %v435
    %v437 = vrot.slane %v347, 1
    %v438 = vsel %vm393, %v435, %v437
    %v439 = vrot.slane %v348, 1
    %v440 = vrot.slane %v349, 1
    %v441 = vsel %vm393, %v439, %v440
    %v442 = vrot.slane %v350, 1
    %v443 = vsel %vm393, %v440, %v442
    %v444 = vrot.slane %v351, 1
    %v445 = vrot.slane %v352, 1
    %v446 = vsel %vm393, %v444, %v445
    %v447 = vrot.slane %v353, 1
    %v448 = vsel %vm393, %v445, %v447
    %v449 = vrot.slane %v354, 1
    %v450 = vrot.slane %v355, 1
    %v451 = vsel %vm393, %v449, %v450
    %v452 = vrot.slane %v356, 1
    %v453 = vsel %vm393, %v450, %v452
    %v478 = vadd.f32 %v297, %v396
    %v479 = vadd.f32 %v298, %v398
    %v480 = vadd.f32 %v299, %v401
    %v481 = vadd.f32 %v300, %v403
    %v482 = vadd.f32 %v301, %v406
    %v483 = vadd.f32 %v302, %v408
    %v484 = vadd.f32 %v303, %v411
    %v485 = vadd.f32 %v304, %v413
    %v486 = vadd.f32 %v305, %v416
    %v487 = vadd.f32 %v306, %v418
    %v488 = vadd.f32 %v307, %v421
    %v489 = vadd.f32 %v308, %v423
    %v490 = vadd.f32 %v309, %v426
    %v491 = vadd.f32 %v310, %v428
    %v492 = vadd.f32 %v311, %v431
    %v493 = vadd.f32 %v312, %v433
    %v494 = vadd.f32 %v313, %v436
    %v495 = vadd.f32 %v314, %v438
    %v496 = vadd.f32 %v315, %v441
    %v497 = vadd.f32 %v316, %v443
    %v498 = vadd.f32 %v317, %v446
    %v499 = vadd.f32 %v318, %v448
    %v500 = vadd.f32 %v319, %v451
    %v501 = vadd.f32 %v320, %v453
    %v502 = vmul.f32 %v285, 0.30780134
    %v503 = vmul.f32 %v286, 0.30780134
    %v504 = vmul.f32 %v287, 0.30780134
    %v505 = vmul.f32 %v288, 0.30780134
    %v506 = vmul.f32 %v289, 0.30780134
    %v507 = vmul.f32 %v290, 0.30780134
    %v508 = vmul.f32 %v291, 0.30780134
    %v509 = vmul.f32 %v292, 0.30780134
    %v510 = vmul.f32 %v293, 0.30780134
    %v511 = vmul.f32 %v294, 0.30780134
    %v512 = vmul.f32 %v295, 0.30780134
    %v513 = vmul.f32 %v296, 0.30780134
    %vm550 = vcmask 1045504
    %v551 = vrot.slane %v297, 2
    %v552 = vrot.slane %v298, 2
    %v553 = vsel %vm550, %v551, %v552
    %v554 = vrot.slane %v502, 2
    %v555 = vsel %vm550, %v552, %v554
    %v556 = vrot.slane %v299, 2
    %v557 = vrot.slane %v300, 2
    %v558 = vsel %vm550, %v556, %v557
    %v559 = vrot.slane %v503, 2
    %v560 = vsel %vm550, %v557, %v559
    %v561 = vrot.slane %v301, 2
    %v562 = vrot.slane %v302, 2
    %v563 = vsel %vm550, %v561, %v562
    %v564 = vrot.slane %v504, 2
    %v565 = vsel %vm550, %v562, %v564
    %v566 = vrot.slane %v303, 2
    %v567 = vrot.slane %v304, 2
    %v568 = vsel %vm550, %v566, %v567
    %v569 = vrot.slane %v505, 2
    %v570 = vsel %vm550, %v567, %v569
    %v571 = vrot.slane %v305, 2
    %v572 = vrot.slane %v306, 2
    %v573 = vsel %vm550, %v571, %v572
    %v574 = vrot.slane %v506, 2
    %v575 = vsel %vm550, %v572, %v574
    %v576 = vrot.slane %v307, 2
    %v577 = vrot.slane %v308, 2
    %v578 = vsel %vm550, %v576, %v577
    %v579 = vrot.slane %v507, 2
    %v580 = vsel %vm550, %v577, %v579
    %v581 = vrot.slane %v309, 2
    %v582 = vrot.slane %v310, 2
    %v583 = vsel %vm550, %v581, %v582
    %v584 = vrot.slane %v508, 2
    %v585 = vsel %vm550, %v582, %v584
    %v586 = vrot.slane %v311, 2
    %v587 = vrot.slane %v312, 2
    %v588 = vsel %vm550, %v586, %v587
    %v589 = vrot.slane %v509, 2
    %v590 = vsel %vm550, %v587, %v589
    %v591 = vrot.slane %v313, 2
    %v592 = vrot.slane %v314, 2
    %v593 = vsel %vm550, %v591, %v592
    %v594 = vrot.slane %v510, 2
    %v595 = vsel %vm550, %v592, %v594
    %v596 = vrot.slane %v315, 2
    %v597 = vrot.slane %v316, 2
    %v598 = vsel %vm550, %v596, %v597
    %v599 = vrot.slane %v511, 2
    %v600 = vsel %vm550, %v597, %v599
    %v601 = vrot.slane %v317, 2
    %v602 = vrot.slane %v318, 2
    %v603 = vsel %vm550, %v601, %v602
    %v604 = vrot.slane %v512, 2
    %v605 = vsel %vm550, %v602, %v604
    %v606 = vrot.slane %v319, 2
    %v607 = vrot.slane %v320, 2
    %v608 = vsel %vm550, %v606, %v607
    %v609 = vrot.slane %v513, 2
    %v610 = vsel %vm550, %v607, %v609
    %v635 = vadd.f32 %v478, %v553
    %v636 = vadd.f32 %v479, %v555
    %v637 = vadd.f32 %v480, %v558
    %v638 = vadd.f32 %v481, %v560
    %v639 = vadd.f32 %v482, %v563
    %v640 = vadd.f32 %v483, %v565
    %v641 = vadd.f32 %v484, %v568
    %v642 = vadd.f32 %v485, %v570
    %v643 = vadd.f32 %v486, %v573
    %v644 = vadd.f32 %v487, %v575
    %v645 = vadd.f32 %v488, %v578
    %v646 = vadd.f32 %v489, %v580
    %v647 = vadd.f32 %v490, %v583
    %v648 = vadd.f32 %v491, %v585
    %v649 = vadd.f32 %v492, %v588
    %v650 = vadd.f32 %v493, %v590
    %v651 = vadd.f32 %v494, %v593
    %v652 = vadd.f32 %v495, %v595
    %v653 = vadd.f32 %v496, %v598
    %v654 = vadd.f32 %v497, %v600
    %v655 = vadd.f32 %v498, %v603
    %v656 = vadd.f32 %v499, %v605
    %v657 = vadd.f32 %v500, %v608
    %v658 = vadd.f32 %v501, %v610
    %683 = vrot.lane.b32.xlu0 %v635, 1
    %v684 = vpop.permute.xlu0 %683
    %685 = vrot.lane.b32.xlu0 %v636, 1
    %v686 = vpop.permute.xlu0 %685
    %687 = vrot.lane.b32.xlu0 %v637, 1
    %v688 = vpop.permute.xlu0 %687
    %689 = vrot.lane.b32.xlu0 %v638, 1
    %v690 = vpop.permute.xlu0 %689
    %691 = vrot.lane.b32.xlu0 %v639, 1
    %v692 = vpop.permute.xlu0 %691
    %693 = vrot.lane.b32.xlu0 %v640, 1
    %v694 = vpop.permute.xlu0 %693
    %695 = vrot.lane.b32.xlu0 %v641, 1
    %v696 = vpop.permute.xlu0 %695
    %697 = vrot.lane.b32.xlu0 %v642, 1
    %v698 = vpop.permute.xlu0 %697
    %699 = vrot.lane.b32.xlu0 %v643, 1
    %v700 = vpop.permute.xlu0 %699
    %701 = vrot.lane.b32.xlu0 %v644, 1
    %v702 = vpop.permute.xlu0 %701
    %703 = vrot.lane.b32.xlu0 %v645, 1
    %v704 = vpop.permute.xlu0 %703
    %705 = vrot.lane.b32.xlu0 %v646, 1
    %v706 = vpop.permute.xlu0 %705
    %707 = vrot.lane.b32.xlu0 %v647, 1
    %v708 = vpop.permute.xlu0 %707
    %709 = vrot.lane.b32.xlu0 %v648, 1
    %v710 = vpop.permute.xlu0 %709
    %711 = vrot.lane.b32.xlu0 %v649, 1
    %v712 = vpop.permute.xlu0 %711
    %713 = vrot.lane.b32.xlu0 %v650, 1
    %v714 = vpop.permute.xlu0 %713
    %715 = vrot.lane.b32.xlu0 %v651, 1
    %v716 = vpop.permute.xlu0 %715
    %717 = vrot.lane.b32.xlu0 %v652, 1
    %v718 = vpop.permute.xlu0 %717
    %719 = vrot.lane.b32.xlu0 %v653, 1
    %v720 = vpop.permute.xlu0 %719
    %721 = vrot.lane.b32.xlu0 %v654, 1
    %v722 = vpop.permute.xlu0 %721
    %723 = vrot.lane.b32.xlu0 %v655, 1
    %v724 = vpop.permute.xlu0 %723
    %725 = vrot.lane.b32.xlu0 %v656, 1
    %v726 = vpop.permute.xlu0 %725
    %727 = vrot.lane.b32.xlu0 %v657, 1
    %v728 = vpop.permute.xlu0 %727
    %729 = vrot.lane.b32.xlu0 %v658, 1
    %v730 = vpop.permute.xlu0 %729
    %vm755 = vcmask 7168
    %v756 = vsel %vm755, 0.0, %v684
    %v757 = vsel %vm755, 0.0, %v686
    %v758 = vsel %vm755, 0.0, %v688
    %v759 = vsel %vm755, 0.0, %v690
    %v760 = vsel %vm755, 0.0, %v692
    %v761 = vsel %vm755, 0.0, %v694
    %v762 = vsel %vm755, 0.0, %v696
    %v763 = vsel %vm755, 0.0, %v698
    %v764 = vsel %vm755, 0.0, %v700
    %v765 = vsel %vm755, 0.0, %v702
    %v766 = vsel %vm755, 0.0, %v704
    %v767 = vsel %vm755, 0.0, %v706
    %v768 = vsel %vm755, 0.0, %v708
    %v769 = vsel %vm755, 0.0, %v710
    %v770 = vsel %vm755, 0.0, %v712
    %v771 = vsel %vm755, 0.0, %v714
    %v772 = vsel %vm755, 0.0, %v716
    %v773 = vsel %vm755, 0.0, %v718
    %v774 = vsel %vm755, 0.0, %v720
    %v775 = vsel %vm755, 0.0, %v722
    %v776 = vsel %vm755, 0.0, %v724
    %v777 = vsel %vm755, 0.0, %v726
    %v778 = vsel %vm755, 0.0, %v728
    %v779 = vsel %vm755, 0.0, %v730
    %vm780 = vcmask 138240
    %v781 = vsel %vm780, %v756, 0.0
    %v782 = vsel %vm780, %v757, 0.0
    %v783 = vsel %vm780, %v758, 0.0
    %v784 = vsel %vm780, %v759, 0.0
    %v785 = vsel %vm780, %v760, 0.0
    %v786 = vsel %vm780, %v761, 0.0
    %v787 = vsel %vm780, %v762, 0.0
    %v788 = vsel %vm780, %v763, 0.0
    %v789 = vsel %vm780, %v764, 0.0
    %v790 = vsel %vm780, %v765, 0.0
    %v791 = vsel %vm780, %v766, 0.0
    %v792 = vsel %vm780, %v767, 0.0
    %v793 = vsel %vm780, %v768, 0.0
    %v794 = vsel %vm780, %v769, 0.0
    %v795 = vsel %vm780, %v770, 0.0
    %v796 = vsel %vm780, %v771, 0.0
    %v797 = vsel %vm780, %v772, 0.0
    %v798 = vsel %vm780, %v773, 0.0
    %v799 = vsel %vm780, %v774, 0.0
    %v800 = vsel %vm780, %v775, 0.0
    %v801 = vsel %vm780, %v776, 0.0
    %v802 = vsel %vm780, %v777, 0.0
    %v803 = vsel %vm780, %v778, 0.0
    %v804 = vsel %vm780, %v779, 0.0
    %v805 = vmul.f32 %v781, 0.30780134
    %v806 = vmul.f32 %v782, 0.30780134
    %v807 = vmul.f32 %v783, 0.30780134
    %v808 = vmul.f32 %v784, 0.30780134
    %v809 = vmul.f32 %v785, 0.30780134
    %v810 = vmul.f32 %v786, 0.30780134
    %v811 = vmul.f32 %v787, 0.30780134
    %v812 = vmul.f32 %v788, 0.30780134
    %v813 = vmul.f32 %v789, 0.30780134
    %v814 = vmul.f32 %v790, 0.30780134
    %v815 = vmul.f32 %v791, 0.30780134
    %v816 = vmul.f32 %v792, 0.30780134
    %v817 = vmul.f32 %v793, 0.30780134
    %v818 = vmul.f32 %v794, 0.30780134
    %v819 = vmul.f32 %v795, 0.30780134
    %v820 = vmul.f32 %v796, 0.30780134
    %v821 = vmul.f32 %v797, 0.30780134
    %v822 = vmul.f32 %v798, 0.30780134
    %v823 = vmul.f32 %v799, 0.30780134
    %v824 = vmul.f32 %v800, 0.30780134
    %v825 = vmul.f32 %v801, 0.30780134
    %v826 = vmul.f32 %v802, 0.30780134
    %v827 = vmul.f32 %v803, 0.30780134
    %v828 = vmul.f32 %v804, 0.30780134
    %v829 = vmul.f32 %v781, 0.38439733
    %v830 = vmul.f32 %v782, 0.38439733
    %v831 = vmul.f32 %v783, 0.38439733
    %v832 = vmul.f32 %v784, 0.38439733
    %v833 = vmul.f32 %v785, 0.38439733
    %v834 = vmul.f32 %v786, 0.38439733
    %v835 = vmul.f32 %v787, 0.38439733
    %v836 = vmul.f32 %v788, 0.38439733
    %v837 = vmul.f32 %v789, 0.38439733
    %v838 = vmul.f32 %v790, 0.38439733
    %v839 = vmul.f32 %v791, 0.38439733
    %v840 = vmul.f32 %v792, 0.38439733
    %v841 = vmul.f32 %v793, 0.38439733
    %v842 = vmul.f32 %v794, 0.38439733
    %v843 = vmul.f32 %v795, 0.38439733
    %v844 = vmul.f32 %v796, 0.38439733
    %v845 = vmul.f32 %v797, 0.38439733
    %v846 = vmul.f32 %v798, 0.38439733
    %v847 = vmul.f32 %v799, 0.38439733
    %v848 = vmul.f32 %v800, 0.38439733
    %v849 = vmul.f32 %v801, 0.38439733
    %v850 = vmul.f32 %v802, 0.38439733
    %v851 = vmul.f32 %v803, 0.38439733
    %v852 = vmul.f32 %v804, 0.38439733
    %877 = vrot.lane.b32.xlu0 %v829, 127
    %v878 = vpop.permute.xlu0 %877
    %879 = vrot.lane.b32.xlu0 %v830, 127
    %v880 = vpop.permute.xlu0 %879
    %881 = vrot.lane.b32.xlu0 %v831, 127
    %v882 = vpop.permute.xlu0 %881
    %883 = vrot.lane.b32.xlu0 %v832, 127
    %v884 = vpop.permute.xlu0 %883
    %885 = vrot.lane.b32.xlu0 %v833, 127
    %v886 = vpop.permute.xlu0 %885
    %887 = vrot.lane.b32.xlu0 %v834, 127
    %v888 = vpop.permute.xlu0 %887
    %889 = vrot.lane.b32.xlu0 %v835, 127
    %v890 = vpop.permute.xlu0 %889
    %891 = vrot.lane.b32.xlu0 %v836, 127
    %v892 = vpop.permute.xlu0 %891
    %893 = vrot.lane.b32.xlu0 %v837, 127
    %v894 = vpop.permute.xlu0 %893
    %895 = vrot.lane.b32.xlu0 %v838, 127
    %v896 = vpop.permute.xlu0 %895
    %897 = vrot.lane.b32.xlu0 %v839, 127
    %v898 = vpop.permute.xlu0 %897
    %899 = vrot.lane.b32.xlu0 %v840, 127
    %v900 = vpop.permute.xlu0 %899
    %901 = vrot.lane.b32.xlu0 %v841, 127
    %v902 = vpop.permute.xlu0 %901
    %903 = vrot.lane.b32.xlu0 %v842, 127
    %v904 = vpop.permute.xlu0 %903
    %905 = vrot.lane.b32.xlu0 %v843, 127
    %v906 = vpop.permute.xlu0 %905
    %907 = vrot.lane.b32.xlu0 %v844, 127
    %v908 = vpop.permute.xlu0 %907
    %909 = vrot.lane.b32.xlu0 %v845, 127
    %v910 = vpop.permute.xlu0 %909
    %911 = vrot.lane.b32.xlu0 %v846, 127
    %v912 = vpop.permute.xlu0 %911
    %913 = vrot.lane.b32.xlu0 %v847, 127
    %v914 = vpop.permute.xlu0 %913
    %915 = vrot.lane.b32.xlu0 %v848, 127
    %v916 = vpop.permute.xlu0 %915
    %917 = vrot.lane.b32.xlu0 %v849, 127
    %v918 = vpop.permute.xlu0 %917
    %919 = vrot.lane.b32.xlu0 %v850, 127
    %v920 = vpop.permute.xlu0 %919
    %921 = vrot.lane.b32.xlu0 %v851, 127
    %v922 = vpop.permute.xlu0 %921
    %923 = vrot.lane.b32.xlu0 %v852, 127
    %v924 = vpop.permute.xlu0 %923
    %v949 = vadd.f32 %v805, %v878
    %v950 = vadd.f32 %v806, %v880
    %v951 = vadd.f32 %v807, %v882
    %v952 = vadd.f32 %v808, %v884
    %v953 = vadd.f32 %v809, %v886
    %v954 = vadd.f32 %v810, %v888
    %v955 = vadd.f32 %v811, %v890
    %v956 = vadd.f32 %v812, %v892
    %v957 = vadd.f32 %v813, %v894
    %v958 = vadd.f32 %v814, %v896
    %v959 = vadd.f32 %v815, %v898
    %v960 = vadd.f32 %v816, %v900
    %v961 = vadd.f32 %v817, %v902
    %v962 = vadd.f32 %v818, %v904
    %v963 = vadd.f32 %v819, %v906
    %v964 = vadd.f32 %v820, %v908
    %v965 = vadd.f32 %v821, %v910
    %v966 = vadd.f32 %v822, %v912
    %v967 = vadd.f32 %v823, %v914
    %v968 = vadd.f32 %v824, %v916
    %v969 = vadd.f32 %v825, %v918
    %v970 = vadd.f32 %v826, %v920
    %v971 = vadd.f32 %v827, %v922
    %v972 = vadd.f32 %v828, %v924
    %997 = vrot.lane.b32.xlu0 %v805, 126
    %v998 = vpop.permute.xlu0 %997
    %999 = vrot.lane.b32.xlu0 %v806, 126
    %v1000 = vpop.permute.xlu0 %999
    %1001 = vrot.lane.b32.xlu0 %v807, 126
    %v1002 = vpop.permute.xlu0 %1001
    %1003 = vrot.lane.b32.xlu0 %v808, 126
    %v1004 = vpop.permute.xlu0 %1003
    %1005 = vrot.lane.b32.xlu0 %v809, 126
    %v1006 = vpop.permute.xlu0 %1005
    %1007 = vrot.lane.b32.xlu0 %v810, 126
    %v1008 = vpop.permute.xlu0 %1007
    %1009 = vrot.lane.b32.xlu0 %v811, 126
    %v1010 = vpop.permute.xlu0 %1009
    %1011 = vrot.lane.b32.xlu0 %v812, 126
    %v1012 = vpop.permute.xlu0 %1011
    %1013 = vrot.lane.b32.xlu0 %v813, 126
    %v1014 = vpop.permute.xlu0 %1013
    %1015 = vrot.lane.b32.xlu0 %v814, 126
    %v1016 = vpop.permute.xlu0 %1015
    %1017 = vrot.lane.b32.xlu0 %v815, 126
    %v1018 = vpop.permute.xlu0 %1017
    %1019 = vrot.lane.b32.xlu0 %v816, 126
    %v1020 = vpop.permute.xlu0 %1019
    %1021 = vrot.lane.b32.xlu0 %v817, 126
    %v1022 = vpop.permute.xlu0 %1021
    %1023 = vrot.lane.b32.xlu0 %v818, 126
    %v1024 = vpop.permute.xlu0 %1023
    %1025 = vrot.lane.b32.xlu0 %v819, 126
    %v1026 = vpop.permute.xlu0 %1025
    %1027 = vrot.lane.b32.xlu0 %v820, 126
    %v1028 = vpop.permute.xlu0 %1027
    %1029 = vrot.lane.b32.xlu0 %v821, 126
    %v1030 = vpop.permute.xlu0 %1029
    %1031 = vrot.lane.b32.xlu0 %v822, 126
    %v1032 = vpop.permute.xlu0 %1031
    %1033 = vrot.lane.b32.xlu0 %v823, 126
    %v1034 = vpop.permute.xlu0 %1033
    %1035 = vrot.lane.b32.xlu0 %v824, 126
    %v1036 = vpop.permute.xlu0 %1035
    %1037 = vrot.lane.b32.xlu0 %v825, 126
    %v1038 = vpop.permute.xlu0 %1037
    %1039 = vrot.lane.b32.xlu0 %v826, 126
    %v1040 = vpop.permute.xlu0 %1039
    %1041 = vrot.lane.b32.xlu0 %v827, 126
    %v1042 = vpop.permute.xlu0 %1041
    %1043 = vrot.lane.b32.xlu0 %v828, 126
    %v1044 = vpop.permute.xlu0 %1043
    %v1069 = vadd.f32 %v949, %v998
    %v1070 = vadd.f32 %v950, %v1000
    %v1071 = vadd.f32 %v951, %v1002
    %v1072 = vadd.f32 %v952, %v1004
    %v1073 = vadd.f32 %v953, %v1006
    %v1074 = vadd.f32 %v954, %v1008
    %v1075 = vadd.f32 %v955, %v1010
    %v1076 = vadd.f32 %v956, %v1012
    %v1077 = vadd.f32 %v957, %v1014
    %v1078 = vadd.f32 %v958, %v1016
    %v1079 = vadd.f32 %v959, %v1018
    %v1080 = vadd.f32 %v960, %v1020
    %v1081 = vadd.f32 %v961, %v1022
    %v1082 = vadd.f32 %v962, %v1024
    %v1083 = vadd.f32 %v963, %v1026
    %v1084 = vadd.f32 %v964, %v1028
    %v1085 = vadd.f32 %v965, %v1030
    %v1086 = vadd.f32 %v966, %v1032
    %v1087 = vadd.f32 %v967, %v1034
    %v1088 = vadd.f32 %v968, %v1036
    %v1089 = vadd.f32 %v969, %v1038
    %v1090 = vadd.f32 %v970, %v1040
    %v1091 = vadd.f32 %v971, %v1042
    %v1092 = vadd.f32 %v972, %v1044
    %vm1093 = vcmask 130048
    %1094 = vst.msk [vmem:[#allocation8] sm:$0xff] %vm1093, %v1069
    %1095 = vst.msk [vmem:[#allocation8 + $0x8] sm:$0xff] %vm1093, %v1070
    %1096 = vst.msk [vmem:[#allocation8 + $0x10] sm:$0xff] %vm1093, %v1071
    %1097 = vst.msk [vmem:[#allocation8 + $0x18] sm:$0xff] %vm1093, %v1072
    %1098 = vst.msk [vmem:[#allocation8 + $0x20] sm:$0xff] %vm1093, %v1073
    %1099 = vst.msk [vmem:[#allocation8 + $0x28] sm:$0xff] %vm1093, %v1074
    %1100 = vst.msk [vmem:[#allocation8 + $0x30] sm:$0xff] %vm1093, %v1075
    %1101 = vst.msk [vmem:[#allocation8 + $0x38] sm:$0xff] %vm1093, %v1076
    %1102 = vst.msk [vmem:[#allocation8 + $0x40] sm:$0xff] %vm1093, %v1077
    %1103 = vst.msk [vmem:[#allocation8 + $0x48] sm:$0xff] %vm1093, %v1078
    %1104 = vst.msk [vmem:[#allocation8 + $0x50] sm:$0xff] %vm1093, %v1079
    %1105 = vst.msk [vmem:[#allocation8 + $0x58] sm:$0xff] %vm1093, %v1080
    %1106 = vst.msk [vmem:[#allocation8 + $0x60] sm:$0xff] %vm1093, %v1081
    %1107 = vst.msk [vmem:[#allocation8 + $0x68] sm:$0xff] %vm1093, %v1082
    %1108 = vst.msk [vmem:[#allocation8 + $0x70] sm:$0xff] %vm1093, %v1083
    %1109 = vst.msk [vmem:[#allocation8 + $0x78] sm:$0xff] %vm1093, %v1084
    %1110 = vst.msk [vmem:[#allocation8 + $0x80] sm:$0xff] %vm1093, %v1085
    %1111 = vst.msk [vmem:[#allocation8 + $0x88] sm:$0xff] %vm1093, %v1086
    %1112 = vst.msk [vmem:[#allocation8 + $0x90] sm:$0xff] %vm1093, %v1087
    %1113 = vst.msk [vmem:[#allocation8 + $0x98] sm:$0xff] %vm1093, %v1088
    %1114 = vst.msk [vmem:[#allocation8 + $0xa0] sm:$0xff] %vm1093, %v1089
    %1115 = vst.msk [vmem:[#allocation8 + $0xa8] sm:$0xff] %vm1093, %v1090
    %1116 = vst.msk [vmem:[#allocation8 + $0xb0] sm:$0xff] %vm1093, %v1091
    %1117 = vst.msk [vmem:[#allocation8 + $0xb8] sm:$0xff] %vm1093, %v1092
    // Predicated region
    $region26: #{tpu_custom_call.1} parent=1 // pred_check
      _
    $region27: #{tpu_custom_call.1} parent=1 // pred_check_branch
      %1119 = sbr.rel (0) target = $region29
    $region28: #{tpu_custom_call.1} parent=1 // pred_region
      %s1121 = ssub.s32 3072, 3072
      %1122 = vsyncadd [#allocation4], %s1121
      %s1123 = sshll.u32 [#allocation8], 4
      %s1124 = int_to_ptr.vmem [resolvable:$true] %s1123
      %1129 = dma.vmem_to_hbm [thread:$0]  %s1124, 3072, %s3, [#allocation4], 128, 128, 8
    $region29: #{tpu_custom_call.1} parent=1 // pred_fallthru
      _
    // Predicated region
    $region30: #{tpu_custom_call.1} parent=1 // pred_check
      _
    $region31: #{tpu_custom_call.1} parent=1 // pred_check_branch
      %1131 = sbr.rel (0) target = $region33
    $region32: #{tpu_custom_call.1} parent=1 // pred_region
      %1132 = dma.done [#allocation4], 3072
    $region33: #{tpu_custom_call.1} parent=1 // pred_fallthru
      _
    %1133 = vsyncpa [#allocation3], 1
    %1134 = vsyncpa [#allocation6], 1
    %1135 = vsyncpa [#allocation4], 1

</llo_original>
